<compile_context>
chip_gen: v6e
topology: v6e:2x2x1
jax: 0.10.0
libtpu: 0.0.40
codegen_flags: <defaults>
</compile_context>

<pallas_src>
import functools

import jax
import jax.numpy as jnp
import numpy as np
from jax.experimental import pallas as pl
from jax.experimental.pallas import tpu as pltpu

_MIB = 1024 * 1024


def _round_up(a, b):
    return (a + b - 1) // b * b


def _vmem_capacity_bytes():
    """Physical per-core VMEM (128 MiB on v5e/v6e, 64 MiB on v7x)."""
    try:
        cap = int(pltpu.get_tpu_info().vmem_capacity_bytes)
        if cap > 0:
            return cap
    except Exception:
        pass
    return 64 * _MIB  # conservative fallback (v7x per-core)


def _default_tile_n():
    """MXU-shaped row tile: 256 on v6e/v7x (2x256x256 MXUs), 128 on v5e."""
    try:
        kind = jax.devices()[0].device_kind.lower()
    except Exception:
        return 256
    if "v5" in kind and ("lite" in kind or "v5e" in kind):
        return 128
    return 256


# ---------------------------------------------------------------------------
# Pass 1 kernel: Chebyshev recursion.
# Grid = (K-1, n_tiles); k axis OUTER (all row tiles of order kk finish before
# order kk+1 starts), row-tile axis INNER. Both axes sequential.
#   kk == 1 : Tx_1[tile] = L[tile, :] @ x
#   kk >= 2 : Tx_kk[tile] = 2 * L[tile, :] @ Tx_{kk-1} - Tx_{kk-2}[tile]
# Each step writes Tx_kk[tile] to its own block of the stacked HBM output and
# (if a later order still needs it) into the ping-pong VMEM scratch.
# ---------------------------------------------------------------------------
def _cheb_recursion_kernel(l_ref, x_ref, tx_out_ref, sc_a, sc_b, *,
                           k_order, l_resident):
    k = pl.program_id(0)                       # Chebyshev order - 1
    i = pl.program_id(1)                       # node row tile
    tile_n, f_pad = tx_out_ref.shape           # static ints
    row0 = pl.multiple_of(i * tile_n, tile_n)
    rows = pl.ds(row0, tile_n)

    # This tile's rows of L_hat: streamed (tile_n, n_pad) block, or sliced out
    # of the resident full (n_pad, n_pad) block.
    l_tile = l_ref[rows, :] if l_resident else l_ref[...]

    # Static dispatch on the Chebyshev order so every buffer choice and slice
    # offset is static (lane-aligned, no dynamic minor-dim indexing).
    for kk in range(1, k_order):
        @pl.when(k == kk - 1)
        def _(kk=kk):
            # Ping-pong roles: order kk writes slot (kk-1) % 2, which is the
            # slot holding Tx_{kk-2} (consumed below before the overwrite).
            write_sc = sc_a if (kk - 1) % 2 == 0 else sc_b
            if kk == 1:
                prev = x_ref[...]                       # Tx_0 = x (full graph)
            else:
                prev_sc = sc_a if (kk - 2) % 2 == 0 else sc_b
                prev = prev_sc[...]                     # Tx_{kk-1} (full graph)
            t = jnp.dot(l_tile, prev, preferred_element_type=jnp.float32)
            if kk == 2:
                t = 2.0 * t - x_ref[rows, :].astype(jnp.float32)
            elif kk >= 3:
                t = 2.0 * t - write_sc[rows, :].astype(jnp.float32)
            tx_out_ref[...] = t.astype(tx_out_ref.dtype)
            if kk < k_order - 1:       # next order still needs Tx_kk in VMEM
                write_sc[rows, :] = t.astype(write_sc.dtype)
    # NOTE: Tx is carried in compute_dtype; for large K / ill-conditioned L
    # pass compute_dtype=jnp.float32 (f32 scratch + f32 MXU) for accuracy.


# ---------------------------------------------------------------------------
# Pass 2 kernel: row-parallel fused output matmul.
#   out[tile] = [Tx_0 | Tx_1 | ... | Tx_{K-1}][tile] @ W_stacked + bias
# (Tx_0 comes straight from x; Tx_1.. come from the pass-1 stacked output.)
# ---------------------------------------------------------------------------
def _cheb_output_kernel(*refs, has_txs):
    if has_txs:
        x_ref, txs_ref, w_ref, b_ref, out_ref = refs
    else:
        x_ref, w_ref, b_ref, out_ref = refs
        txs_ref = None
    f_pad = x_ref.shape[1]
    acc = jnp.dot(x_ref[...], w_ref[0:f_pad, :],
                  preferred_element_type=jnp.float32)
    if has_txs:
        acc = acc + jnp.dot(txs_ref[...], w_ref[f_pad:, :],
                            preferred_element_type=jnp.float32)
    out_ref[...] = (acc + b_ref[...].astype(jnp.float32)).astype(out_ref.dtype)


def chebconv_pallas(l_hat, x, weight, bias=None, *, tile_n=None,
                    compute_dtype=jnp.bfloat16, l_resident=None):
    """ChebConv forward (PyG semantics).

    l_hat:  [N, N]          scaled normalized Laplacian (2/lambda_max * L - I)
    x:      [N, F_in]       node features
    weight: [K, F_in, F_out]
    bias:   [F_out] or None
    Returns [N, F_out] float32.
    """
    n, f_in = x.shape
    k_order, _, f_out = weight.shape
    if bias is None:
        bias = jnp.zeros((f_out,), jnp.float32)

    # Lane-dense padding (multiples of 128).
    # TODO(synk): when f_in << 128, batch several graphs / feature groups into
    # the lane dimension to fill the 128-lane vreg and the MXU.
    f_pad = _round_up(f_in, 128)
    fo_pad = _round_up(f_out, 128)
    itemsize = jnp.dtype(compute_dtype).itemsize

    # ---- VMEM budget from the actual chip (no hard 64 MiB clamp) -----------
    cap = _vmem_capacity_bytes()
    vmem_limit = int(max(32 * _MIB, min(cap - 4 * _MIB, int(0.90 * cap))))
    plan_budget = max(16 * _MIB, vmem_limit - 8 * _MIB)

    def _p1_bytes(tile, resident):
        npad = _round_up(n, tile)
        l_b = (2 * npad * npad) if resident else (2 * tile * npad)
        return (l_b                    # L blocks (double-buffered by default)
                + 2 * npad * f_pad     # resident x (constant block, 2 bufs)
                + 2 * npad * f_pad     # Tx ping-pong scratch (2 buffers)
                + 2 * tile * f_pad     # stacked-Tx output tiles
                ) * itemsize

    # ---- tile plan: MXU-shaped rows, shrink only if VMEM-bound --------------
    if tile_n is None:
        tile_n = _default_tile_n()
    tile_n = max(16, min(int(tile_n), _round_up(n, 16)))
    tile_n = _round_up(tile_n, 16)                 # bf16 sublane packing = 16
    while tile_n > 16 and _p1_bytes(tile_n, resident=False) > plan_budget:
        tile_n = max(16, _round_up(tile_n // 2, 16))
    # TODO(synk): for huge graphs where even tile_n=16 overflows VMEM, add an
    # N-contraction grid axis (column-tiled L + f32 accumulator) and/or spill
    # the Tx_{k-1}/Tx_{k-2} buffers to HBM.

    n_pad = _round_up(n, tile_n)
    n_tiles = n_pad // tile_n

    # Resident-L fast path: DMA L once instead of (K-1) times whenever it fits
    # (most valuable on v5e/v6e: 128 MiB VMEM, lowest HBM bandwidth).
    if l_resident is None:
        use_resident_l = (k_order > 1
                          and _p1_bytes(tile_n, resident=True) <= plan_budget)
    else:
        use_resident_l = bool(l_resident)

    # ---- zero-padded operands (padding cannot leak into the sliced result) --
    l_p = jnp.zeros((n_pad, n_pad), compute_dtype).at[:n, :n].set(
        l_hat.astype(compute_dtype))
    x_p = jnp.zeros((n_pad, f_pad), compute_dtype).at[:n, :f_in].set(
        x.astype(compute_dtype))
    w_p = jnp.zeros((k_order, f_pad, fo_pad), compute_dtype)
    w_p = w_p.at[:, :f_in, :f_out].set(weight.astype(compute_dtype))
    w_stacked = w_p.reshape(k_order * f_pad, fo_pad)        # [K*F_PAD, FO_PAD]
    b_p = jnp.zeros((1, fo_pad), jnp.float32).at[0, :f_out].set(
        bias.astype(jnp.float32))

    # ---- Pass 1: recursion -> stacked [Tx_1 | ... | Tx_{K-1}] in HBM --------
    txs = None
    if k_order > 1:
        if use_resident_l:
            # Constant block index -> DMA'd once, stays resident in VMEM.
            # TODO(synk): pipeline_mode=pl.Buffered(1) on the constant L / x
            # blocks would halve their VMEM footprint; kept off for maximal
            # lowering portability (the budget above accounts for 2 buffers).
            l_spec = pl.BlockSpec((n_pad, n_pad), lambda k, i: (0, 0))
        else:
            # Streamed (tile_n, n_pad) row tiles: HBM->VMEM DMA overlaps MXU.
            l_spec = pl.BlockSpec((tile_n, n_pad), lambda k, i: (i, 0))

        txs = pl.pallas_call(
            functools.partial(_cheb_recursion_kernel, k_order=k_order,
                              l_resident=use_resident_l),
            out_shape=jax.ShapeDtypeStruct(
                (n_pad, (k_order - 1) * f_pad), compute_dtype),
            grid_spec=pltpu.PrefetchScalarGridSpec(
                num_scalar_prefetch=0,
                grid=(k_order - 1, n_tiles),
                in_specs=[
                    l_spec,
                    # Full x (= Tx_0), constant block index -> DMA'd once.
                    pl.BlockSpec((n_pad, f_pad), lambda k, i: (0, 0)),
                ],
                # Each (k, i) step writes its own distinct block exactly once
                # -> no redundant / uninitialized HBM writebacks.
                out_specs=pl.BlockSpec((tile_n, f_pad), lambda k, i: (i, k)),
                scratch_shapes=[
                    pltpu.VMEM((n_pad, f_pad), compute_dtype),   # ping
                    pltpu.VMEM((n_pad, f_pad), compute_dtype),   # pong
                ],
            ),
            compiler_params=pltpu.CompilerParams(
                # BOTH axes must stay sequential ("arbitrary"): each row tile
                # of order k reads the FULL-graph Tx_{k-1} from the shared
                # VMEM scratch. Do NOT flip either axis to "parallel".
                dimension_semantics=("arbitrary", "arbitrary"),
                vmem_limit_bytes=vmem_limit,
            ),
        )(l_p, x_p)

    # ---- Pass 2: row-parallel fused output matmul (+ bias) ------------------
    has_txs = k_order > 1
    in_specs = [pl.BlockSpec((tile_n, f_pad), lambda i: (i, 0))]
    args = [x_p]
    if has_txs:
        in_specs.append(
            pl.BlockSpec((tile_n, (k_order - 1) * f_pad), lambda i: (i, 0)))
        args.append(txs)
    in_specs += [
        pl.BlockSpec((k_order * f_pad, fo_pad), lambda i: (0, 0)),  # W stacked
        pl.BlockSpec((1, fo_pad), lambda i: (0, 0)),                # bias
    ]
    args += [w_stacked, b_p]

    out_padded = pl.pallas_call(
        functools.partial(_cheb_output_kernel, has_txs=has_txs),
        out_shape=jax.ShapeDtypeStruct((n_pad, fo_pad), jnp.float32),
        grid_spec=pltpu.PrefetchScalarGridSpec(
            num_scalar_prefetch=0,
            grid=(n_tiles,),
            in_specs=in_specs,
            out_specs=pl.BlockSpec((tile_n, fo_pad), lambda i: (i, 0)),
        ),
        compiler_params=pltpu.CompilerParams(
            # Row tiles are independent here -> shard across TensorCores
            # (v7x megacore).
            dimension_semantics=("parallel",),
            vmem_limit_bytes=vmem_limit,
        ),
    )(*args)

    return out_padded[:n, :f_out]


# ---------------------------------------------------------------------------
# Plain-JAX glue: edge_index -> dense scaled normalized Laplacian.
# PyG ChebConv semantics: normalization='sym', self-loops removed, and
# lambda_max = 2.0 (PyG's default when lambda_max is not supplied).
# ---------------------------------------------------------------------------
def scaled_laplacian_dense(edge_index, num_nodes, lambda_max=2.0):
    row, col = edge_index[0], edge_index[1]
    adj = jnp.zeros((num_nodes, num_nodes), jnp.float32).at[row, col].add(1.0)
    adj = adj * (1.0 - jnp.eye(num_nodes, dtype=jnp.float32))  # drop self loops
    deg = adj.sum(axis=1)
    dinv = jnp.where(deg > 0, 1.0 / jnp.sqrt(jnp.maximum(deg, 1e-12)), 0.0)
    a_norm = dinv[:, None] * adj * dinv[None, :]
    lap = jnp.eye(num_nodes, dtype=jnp.float32) - a_norm       # L = I - A_norm
    return (2.0 / lambda_max) * lap - jnp.eye(num_nodes, dtype=jnp.float32)


def chebconv_ref(l_hat, x, weight, bias):
    """Pure-JAX f32 reference (PyG ChebConv forward)."""
    k_order = weight.shape[0]
    tx0 = x
    out = jnp.dot(tx0, weight[0], preferred_element_type=jnp.float32)
    if k_order > 1:
        tx1 = jnp.dot(l_hat, tx0, preferred_element_type=jnp.float32)
        out = out + jnp.dot(tx1, weight[1], preferred_element_type=jnp.float32)
        for k in range(2, k_order):
            tx2 = 2.0 * jnp.dot(l_hat, tx1, preferred_element_type=jnp.float32) - tx0
            out = out + jnp.dot(tx2, weight[k], preferred_element_type=jnp.float32)
            tx0, tx1 = tx1, tx2
    return out + bias[None, :]


if __name__ == "__main__":
    # Small deterministic problem: 300 nodes (several 128-row tiles + padding),
    # dim_in=16 (padded to 128 lanes), dim_out=32 (padded to 128), cheb_K=3.
    num_nodes, dim_in, dim_out, cheb_k = 300, 16, 32, 3

    key = jax.random.PRNGKey(0)
    kx, kw, kb = jax.random.split(key, 3)

    # Node features.
    x = jax.random.normal(kx, (num_nodes, dim_in), jnp.float32)

    # Deterministic undirected ring + chords graph as edge_index [2, E].
    src = np.arange(num_nodes)
    ring_dst = (src + 1) % num_nodes
    chord_dst = (src + 7) % num_nodes
    e_rows = np.concatenate([src, ring_dst, src, chord_dst])
    e_cols = np.concatenate([ring_dst, src, chord_dst, src])
    edge_index = jnp.asarray(np.stack([e_rows, e_cols]), jnp.int32)

    # Parameters: K linear maps (glorot-ish) + bias.
    scale = jnp.sqrt(6.0 / (dim_in + dim_out))
    weight = jax.random.uniform(kw, (cheb_k, dim_in, dim_out), jnp.float32,
                                minval=-scale, maxval=scale)
    bias = 0.1 * jax.random.normal(kb, (dim_out,), jnp.float32)

    l_hat = scaled_laplacian_dense(edge_index, num_nodes)
    ref = chebconv_ref(l_hat, x, weight, bias)

    # 1) Exact-semantics check: f32 MXU path, streamed-L, multiple row tiles.
    out_f32 = jax.block_until_ready(
        chebconv_pallas(l_hat, x, weight, bias, tile_n=128,
                        compute_dtype=jnp.float32, l_resident=False))
    np.testing.assert_allclose(np.asarray(out_f32), np.asarray(ref),
                               rtol=1e-4, atol=1e-4)

    # 2) bf16 fast path with the resident-L plan (L DMA'd once).
    out_res = jax.block_until_ready(
        chebconv_pallas(l_hat, x, weight, bias, tile_n=128, l_resident=True))
    np.testing.assert_allclose(np.asarray(out_res), np.asarray(ref),
                               rtol=5e-2, atol=5e-2)

    # 3) Default production path: auto MXU-shaped tile + auto L residency.
    out_auto = jax.block_until_ready(chebconv_pallas(l_hat, x, weight, bias))
    np.testing.assert_allclose(np.asarray(out_auto), np.asarray(ref),
                               rtol=5e-2, atol=5e-2)

    print("KERNEL_OK")
</pallas_src>

<mosaic_0001>
module attributes {stable_mosaic.version = 11 : i64} {
  func.func @_cheb_recursion_kernel(%arg0: i32, %arg1: i32, %arg2: memref<128x384xf32, #tpu.memory_space<vmem>>, %arg3: memref<384x128xf32, #tpu.memory_space<vmem>>, %arg4: memref<128x128xf32, #tpu.memory_space<vmem>>, %arg5: memref<384x128xf32, #tpu.memory_space<vmem>>, %arg6: memref<384x128xf32, #tpu.memory_space<vmem>>) attributes {dimension_semantics = [#tpu.dimension_semantics<arbitrary>, #tpu.dimension_semantics<arbitrary>], iteration_bounds = array<i64: 2, 3>, scalar_prefetch = 0 : i64, scratch_operands = 2 : i64, tpu.core_type = #tpu.core_type<tc>, window_params = [{transform_indices = @transform_0, window_bounds = array<i64: 128, 384>}, {pipeline_mode = #tpu.pipeline_mode<synchronous>, transform_indices = @transform_1, window_bounds = array<i64: 384, 128>}, {transform_indices = @transform_2, window_bounds = array<i64: 128, 128>}]} {
    %c128_i32 = arith.constant 128 : i32
    %0 = arith.muli %arg1, %c128_i32 : i32
    %1 = tpu.assume_multiple %0, 128 : i32
    %c0 = arith.constant 0 : index
    %c0_0 = arith.constant 0 : index
    %2 = vector.load %arg2[%c0, %c0_0] : memref<128x384xf32, #tpu.memory_space<vmem>>, vector<128x384xf32>
    %c0_i32 = arith.constant 0 : i32
    %3 = arith.cmpi eq, %arg0, %c0_i32 : i32
    %4 = arith.extui %3 : i1 to i32
    %c0_i32_1 = arith.constant 0 : i32
    %5 = arith.cmpi ne, %4, %c0_i32_1 : i32
    scf.if %5 {
      %c0_3 = arith.constant 0 : index
      %c0_4 = arith.constant 0 : index
      %9 = vector.load %arg3[%c0_3, %c0_4] : memref<384x128xf32, #tpu.memory_space<vmem>>, vector<384x128xf32>
      %cst = arith.constant dense<0.000000e+00> : vector<128x128xf32>
      %10 = tpu.matmul %2, %9, %cst {dimension_numbers = #tpu.dot_dimension_numbers<[1], [0], [0], [1], [0, 0, 1, 1], [], []>} : vector<128x384xf32>, vector<384x128xf32>, vector<128x128xf32> -> vector<128x128xf32>
      %c0_5 = arith.constant 0 : index
      %c0_6 = arith.constant 0 : index
      %11 = vector.load %arg4[%c0_5, %c0_6] : memref<128x128xf32, #tpu.memory_space<vmem>>, vector<128x128xf32>
      tpu.vector_store %arg4[%c0_5, %c0_6], %10 {strides = array<i32>} : memref<128x128xf32, #tpu.memory_space<vmem>>, vector<128x128xf32>,
      %12 = arith.index_cast %1 : i32 to index
      %c0_7 = arith.constant 0 : index
      %13 = vector.load %arg5[%12, %c0_7] : memref<384x128xf32, #tpu.memory_space<vmem>>, vector<128x128xf32>
      tpu.vector_store %arg5[%12, %c0_7], %10 {strides = array<i32>} : memref<384x128xf32, #tpu.memory_space<vmem>>, vector<128x128xf32>,
    } else {
    }
    %c1_i32 = arith.constant 1 : i32
    %6 = arith.cmpi eq, %arg0, %c1_i32 : i32
    %7 = arith.extui %6 : i1 to i32
    %c0_i32_2 = arith.constant 0 : i32
    %8 = arith.cmpi ne, %7, %c0_i32_2 : i32
    scf.if %8 {
      %c0_3 = arith.constant 0 : index
      %c0_4 = arith.constant 0 : index
      %9 = vector.load %arg5[%c0_3, %c0_4] : memref<384x128xf32, #tpu.memory_space<vmem>>, vector<384x128xf32>
      %cst = arith.constant dense<0.000000e+00> : vector<128x128xf32>
      %10 = tpu.matmul %2, %9, %cst {dimension_numbers = #tpu.dot_dimension_numbers<[1], [0], [0], [1], [0, 0, 1, 1], [], []>} : vector<128x384xf32>, vector<384x128xf32>, vector<128x128xf32> -> vector<128x128xf32>
      %cst_5 = arith.constant 2.000000e+00 : f32
      %11 = vector.broadcast %cst_5 : f32 to vector<128x128xf32>
      %12 = arith.mulf %11, %10 : vector<128x128xf32>
      %13 = arith.index_cast %1 : i32 to index
      %c0_6 = arith.constant 0 : index
      %14 = vector.load %arg3[%13, %c0_6] : memref<384x128xf32, #tpu.memory_space<vmem>>, vector<128x128xf32>
      %15 = arith.subf %12, %14 : vector<128x128xf32>
      %c0_7 = arith.constant 0 : index
      %c0_8 = arith.constant 0 : index
      %16 = vector.load %arg4[%c0_7, %c0_8] : memref<128x128xf32, #tpu.memory_space<vmem>>, vector<128x128xf32>
      tpu.vector_store %arg4[%c0_7, %c0_8], %15 {strides = array<i32>} : memref<128x128xf32, #tpu.memory_space<vmem>>, vector<128x128xf32>,
    } else {
    }
    return
  }
  func.func @transform_0(%arg0: i32, %arg1: i32) -> (i32, i32) {
    %c0_i32 = arith.constant 0 : i32
    %c0_i32_0 = arith.constant 0 : i32
    return %arg1, %c0_i32 : i32, i32
  }
  func.func @transform_1(%arg0: i32, %arg1: i32) -> (i32, i32) {
    %c0_i32 = arith.constant 0 : i32
    %c0_i32_0 = arith.constant 0 : i32
    %c0_i32_1 = arith.constant 0 : i32
    return %c0_i32, %c0_i32_0 : i32, i32
  }
  func.func @transform_2(%arg0: i32, %arg1: i32) -> (i32, i32) {
    %c0_i32 = arith.constant 0 : i32
    return %arg1, %arg0 : i32, i32
  }
}

</mosaic_0001>

<llo_original>
// kernel: tpu_custom_call.1
$region0: #{tpu_custom_call.1}
  #allocation0 [shape = 'u32[]', space=smem, size = 0x4, offset = 0x4, fixed_abs, tag = 'smem constant byte address 0x4 - core index']
  #allocation1 [shape = 'u32[144,128]{1,0:T(1,128)}', space=vmem, size = 0x12000, scoped, tag = 'internal scratch']
  #allocation2 [shape = 'f32[384,128]{1,0:T(8,128)}', space=vmem, size = 0x30000, scoped, tag = 'scratch operand']
  #allocation3 [shape = 'f32[384,128]{1,0:T(8,128)}', space=vmem, size = 0x30000, scoped, tag = 'scratch operand']
  %s0 = inlined_call_operand.hbm [shape: f32[384,384], index: 0, kind: input, shape index: {}]
  %s1 = inlined_call_operand.hbm [shape: f32[384,128], index: 1, kind: input, shape index: {}]
  %s2 = inlined_call_operand.hbm [shape: f32[384,256], index: 2, kind: output, shape index: {}]
  %s3 = sld [smem:[#allocation0]]
  $region57: #{tpu_custom_call.1} parent=0
    _
  %s5 = ssub.s32 1, %s3
  %s6 = scalar_select 0, %s5, %s3
  $region1: #{tpu_custom_call.1} parent=0
    #allocation4 [shape = 'u8[393216]{0}', space=vmem, size = 0x60000, scoped, tag = 'input window, operand 0']
    #allocation5 [shape = 's32[2]{0}', space=sflag, size = 0x8, scoped, tag = 'scoped memory for tpu_custom_call.1']
    #allocation6 [shape = 's32[2]{0}', space=sflag, size = 0x8, scoped, tag = 'scoped memory for tpu_custom_call.1']
    #allocation7 [shape = 'u8[196608]{0}', space=vmem, size = 0x30000, scoped, tag = 'input window, operand 1, single buffered']
    #allocation8 [shape = 's32[1]{0}', space=sflag, size = 0x4, scoped, tag = 'scoped memory for tpu_custom_call.1']
    #allocation9 [shape = 'u8[131072]{0}', space=vmem, size = 0x20000, scoped, tag = 'output window, operand 0']
    %7 = vsyncpa [#allocation5], 0
    %s8 = scalar_lea.sflag [#allocation5], 1
    %9 = vsyncpa %s8, 0
    %10 = vsyncpa [#allocation8], 0
    %11 = vsyncpa [#allocation6], 0
    %s12 = scalar_lea.sflag [#allocation6], 1
    %13 = vsyncpa %s12, 0
    loop: start=0, step=1, limit=8
    $region2: #{tpu_custom_call.1} parent=1 // loop_pre_header
      _
    $region3: #{tpu_custom_call.1} parent=1 // loop_header
      %s15 = sphi 0, %s19
      %p16 = scmp.ge.s32.totalorder %s15, 8
      %s22 = sphi 0, %s34
      %s23 = sphi 0, %s30
      %s24 = sphi 0, %s22
      %s25 = sphi 0, %s23
      %s26 = sphi 0, %s24
      %s27 = sphi 0, %s25
      %s37 = sphi 0, %s39
      %s40 = sphi 0, %s37
      %s41 = sphi 0, %s40
      %s57 = sphi 0, %s41
      %s61 = sphi 0, %s61
      %s63 = sphi 0, %s61
      %s64 = sphi 0, %s63
      %s78 = sphi 0, %s64
      %s86 = sphi 0, %s88
      %s89 = sphi 0, %s86
      %s90 = sphi 0, %s89
      %s106 = sphi 0, %s90
    $region4: #{tpu_custom_call.1} parent=1 // loop_header_branch
      %18 = sbr.rel (%p16) target = $region8
    $region5: #{tpu_custom_call.1} parent=1 // loop_body
      %s20 = ssub.s32 %s15, 1
      %s21 = ssub.s32 %s15, 2
      %s28 = sadd.s32 1, %s23
      %p29 = scmp.ge.s32.totalorder %s28, 3
      %s30 = scalar_select %p29, 0, %s28
      %s31 = sadd.s32 1, %s22
      %s32 = scalar_select %p29, %s31, %s22
      %p33 = scmp.ge.s32.totalorder %s32, 2
      %s34 = scalar_select %p33, 0, %s32
      %s35 = ssub.s32 %s23, %s30
      %p36 = scmp.eq.s32.totalorder %s35, 0
      %s38 = sadd.s32 %s37, 1
      %s39 = scalar_select %p36, %s37, %s38
      %p42 = pneg %p36
      %p43 = scmp.eq.s32.totalorder %s15, 5
      %p44 = por %p42, %p43
      %p45 = scmp.ne.s32.totalorder %s37, %s40
      %p46 = scmp.eq.s32.totalorder %s15, 0
      %p47 = por %p45, %p46
      %p48 = scmp.ne.s32.totalorder %s37, %s40
      %p49 = scmp.eq.s32.totalorder %s20, 5
      %p50 = por %p48, %p49
      %p51 = scmp.ne.s32.totalorder %s40, %s41
      %p52 = scmp.eq.s32.totalorder %s20, 0
      %p53 = por %p51, %p52
      %p54 = scmp.ne.s32.totalorder %s40, %s41
      %p55 = scmp.eq.s32.totalorder %s21, 5
      %p56 = por %p54, %p55
      %p58 = scmp.ne.s32.totalorder %s41, %s57
      %p59 = scmp.eq.s32.totalorder %s21, 0
      %p60 = por %p58, %p59
      %s62 = sadd.s32 %s61, 1
      %p65 = scmp.eq.s32.totalorder %s15, 5
      %p66 = scmp.ne.s32.totalorder %s61, %s63
      %p67 = scmp.eq.s32.totalorder %s15, 0
      %p68 = por %p66, %p67
      %p69 = scmp.ne.s32.totalorder %s61, %s63
      %p70 = scmp.eq.s32.totalorder %s20, 5
      %p71 = por %p69, %p70
      %p72 = scmp.ne.s32.totalorder %s63, %s64
      %p73 = scmp.eq.s32.totalorder %s20, 0
      %p74 = por %p72, %p73
      %p75 = scmp.ne.s32.totalorder %s63, %s64
      %p76 = scmp.eq.s32.totalorder %s21, 5
      %p77 = por %p75, %p76
      %p79 = scmp.ne.s32.totalorder %s64, %s78
      %p80 = scmp.eq.s32.totalorder %s21, 0
      %p81 = por %p79, %p80
      %s82 = ssub.s32 %s23, %s30
      %s83 = ssub.s32 %s22, %s34
      %s84 = sor.u32 %s82, %s83
      %p85 = scmp.eq.s32.totalorder %s84, 0
      %s87 = sadd.s32 %s86, 1
      %s88 = scalar_select %p85, %s86, %s87
      %p91 = pneg %p85
      %p92 = scmp.eq.s32.totalorder %s15, 5
      %p93 = por %p91, %p92
      %p94 = scmp.ne.s32.totalorder %s86, %s89
      %p95 = scmp.eq.s32.totalorder %s15, 0
      %p96 = por %p94, %p95
      %p97 = scmp.ne.s32.totalorder %s86, %s89
      %p98 = scmp.eq.s32.totalorder %s20, 5
      %p99 = por %p97, %p98
      %p100 = scmp.ne.s32.totalorder %s89, %s90
      %p101 = scmp.eq.s32.totalorder %s20, 0
      %p102 = por %p100, %p101
      %p103 = scmp.ne.s32.totalorder %s89, %s90
      %p104 = scmp.eq.s32.totalorder %s21, 5
      %p105 = por %p103, %p104
      %p107 = scmp.ne.s32.totalorder %s90, %s106
      %p108 = scmp.eq.s32.totalorder %s21, 0
      %p109 = por %p107, %p108
      %p110 = scmp.le.s32.totalorder 1, %s15
      %p111 = scmp.lt.s32.totalorder %s15, 7
      %p112 = pnand %p110, %p111
      %p113 = pneg %p112
      // Predicated region
      $region9: #{tpu_custom_call.1} parent=5 // pred_check
        _
      $region10: #{tpu_custom_call.1} parent=5 // pred_check_branch
        %115 = sbr.rel (%p112) target = $region12
      $region11: #{tpu_custom_call.1} parent=5 // pred_region
        %s116 = ssub.s32 %s15, 1
        // Predicated region
        $region13: #{tpu_custom_call.1} parent=11 // pred_check
          %p117 = pneg %p74
        $region14: #{tpu_custom_call.1} parent=11 // pred_check_branch
          %119 = sbr.rel (%p117) target = $region16
        $region15: #{tpu_custom_call.1} parent=11 // pred_region
          %s121 = ssub.s32 6144, 6144
          %122 = vsyncadd [#allocation8], %s121
          %s123 = sshll.u32 [#allocation7], 4
          %s124 = int_to_ptr.vmem [resolvable:$true] %s123
          %129 = dma.hbm_to_vmem [thread:$0]  %s1, 6144, %s124, [#allocation8], 128, 128, 8
        $region16: #{tpu_custom_call.1} parent=11 // pred_fallthru
          _
      $region12: #{tpu_custom_call.1} parent=5 // pred_fallthru
        _
      %p130 = scmp.lt.s32.totalorder %s15, 6
      // Predicated region
      $region17: #{tpu_custom_call.1} parent=5 // pred_check
        %p131 = pneg %p130
      $region18: #{tpu_custom_call.1} parent=5 // pred_check_branch
        %133 = sbr.rel (%p131) target = $region20
      $region19: #{tpu_custom_call.1} parent=5 // pred_region
        // Predicated region
        $region21: #{tpu_custom_call.1} parent=19 // pred_check
          %p134 = pneg %p47
        $region22: #{tpu_custom_call.1} parent=19 // pred_check_branch
          %136 = sbr.rel (%p134) target = $region24
        $region23: #{tpu_custom_call.1} parent=19 // pred_region
          %s137 = sand.u32 %s37, 1
          %s138 = scalar_lea.sflag [#allocation5], %s137
          %s139 = sand.u32 %s37, 1
          %s140 = smul.addr %s139, 384
          %s141 = scalar_lea.vmem [#allocation4], %s140
          %s142 = smul.u32 16, %s23
          %s144 = ssub.s32 6144, 6144
          %145 = vsyncadd %s138, %s144
          %s146 = smul.addr %s142, 3
          %s147 = smul.addr %s146, 128
          %s148 = scalar_lea.hbm %s0, %s147
          %s149 = sshll.u32 %s141, 4
          %s150 = int_to_ptr.vmem [resolvable:$true] %s149
          %155 = dma.hbm_to_vmem [thread:$0]  %s148, 6144, %s150, %s138, 384, 384, 24
        $region24: #{tpu_custom_call.1} parent=19 // pred_fallthru
          _
      $region20: #{tpu_custom_call.1} parent=5 // pred_fallthru
        _
      %p156 = scmp.le.s32.totalorder 1, %s15
      %p157 = scmp.lt.s32.totalorder %s15, 7
      %p158 = pnand %p156, %p157
      %p159 = pneg %p158
      // Predicated region
      $region25: #{tpu_custom_call.1} parent=5 // pred_check
        _
      $region26: #{tpu_custom_call.1} parent=5 // pred_check_branch
        %161 = sbr.rel (%p158) target = $region28
      $region27: #{tpu_custom_call.1} parent=5 // pred_region
        %s162 = ssub.s32 %s15, 1
        %s163 = sand.u32 %s40, 1
        %s164 = scalar_lea.sflag [#allocation5], %s163
        %s165 = sand.u32 %s40, 1
        %s166 = smul.addr %s165, 384
        %s167 = scalar_lea.vmem [#allocation4], %s166
        // Predicated region
        $region29: #{tpu_custom_call.1} parent=27 // pred_check
          %p168 = pneg %p53
        $region30: #{tpu_custom_call.1} parent=27 // pred_check_branch
          %170 = sbr.rel (%p168) target = $region32
        $region31: #{tpu_custom_call.1} parent=27 // pred_region
          %171 = dma.done %s164, 6144
        $region32: #{tpu_custom_call.1} parent=27 // pred_fallthru
          _
        // Predicated region
        $region33: #{tpu_custom_call.1} parent=27 // pred_check
          %p172 = pneg %p74
        $region34: #{tpu_custom_call.1} parent=27 // pred_check_branch
          %174 = sbr.rel (%p172) target = $region36
        $region35: #{tpu_custom_call.1} parent=27 // pred_region
          %175 = dma.done [#allocation8], 6144
        $region36: #{tpu_custom_call.1} parent=27 // pred_fallthru
          _
        %s176 = sand.u32 %s40, 1
        %s177 = scalar_lea.sflag [#allocation5], %s176
        %s178 = sand.u32 %s40, 1
        %s179 = smul.addr %s178, 384
        %s180 = scalar_lea.vmem [#allocation4], %s179
        %p181 = pneg %p53
        %p182 = pneg %p50
        %p183 = pneg %p74
        %p184 = pneg %p71
        %p185 = pneg %p102
        %p186 = pneg %p99
        %s187 = sand.u32 %s89, 1
        %s188 = scalar_lea.sflag [#allocation6], %s187
        %s189 = sand.u32 %s89, 1
        %s190 = smul.addr %s189, 128
        %s191 = scalar_lea.vmem [#allocation9], %s190
        %s192 = smul.u32 16, %s25
        %s193 = smul.u32 16, %s25
        %s194 = smul.u32 %s25, 128
        %v195 = vld [vmem:[%s167] sm:$0xff]
        %v196 = vld [vmem:[%s167 + $0x8] sm:$0xff]
        %v197 = vld [vmem:[%s167 + $0x10] sm:$0xff]
        %v198 = vld [vmem:[%s167 + $0x18] sm:$0xff]
        %v199 = vld [vmem:[%s167 + $0x20] sm:$0xff]
        %v200 = vld [vmem:[%s167 + $0x28] sm:$0xff]
        %v201 = vld [vmem:[%s167 + $0x30] sm:$0xff]
        %v202 = vld [vmem:[%s167 + $0x38] sm:$0xff]
        %v203 = vld [vmem:[%s167 + $0x40] sm:$0xff]
        %v204 = vld [vmem:[%s167 + $0x48] sm:$0xff]
        %v205 = vld [vmem:[%s167 + $0x50] sm:$0xff]
        %v206 = vld [vmem:[%s167 + $0x58] sm:$0xff]
        %v207 = vld [vmem:[%s167 + $0x60] sm:$0xff]
        %v208 = vld [vmem:[%s167 + $0x68] sm:$0xff]
        %v209 = vld [vmem:[%s167 + $0x70] sm:$0xff]
        %v210 = vld [vmem:[%s167 + $0x78] sm:$0xff]
        %v211 = vld [vmem:[%s167 + $0x80] sm:$0xff]
        %v212 = vld [vmem:[%s167 + $0x88] sm:$0xff]
        %v213 = vld [vmem:[%s167 + $0x90] sm:$0xff]
        %v214 = vld [vmem:[%s167 + $0x98] sm:$0xff]
        %v215 = vld [vmem:[%s167 + $0xa0] sm:$0xff]
        %v216 = vld [vmem:[%s167 + $0xa8] sm:$0xff]
        %v217 = vld [vmem:[%s167 + $0xb0] sm:$0xff]
        %v218 = vld [vmem:[%s167 + $0xb8] sm:$0xff]
        %v219 = vld [vmem:[%s167 + $0xc0] sm:$0xff]
        %v220 = vld [vmem:[%s167 + $0xc8] sm:$0xff]
        %v221 = vld [vmem:[%s167 + $0xd0] sm:$0xff]
        %v222 = vld [vmem:[%s167 + $0xd8] sm:$0xff]
        %v223 = vld [vmem:[%s167 + $0xe0] sm:$0xff]
        %v224 = vld [vmem:[%s167 + $0xe8] sm:$0xff]
        %v225 = vld [vmem:[%s167 + $0xf0] sm:$0xff]
        %v226 = vld [vmem:[%s167 + $0xf8] sm:$0xff]
        %v227 = vld [vmem:[%s167 + $0x100] sm:$0xff]
        %v228 = vld [vmem:[%s167 + $0x108] sm:$0xff]
        %v229 = vld [vmem:[%s167 + $0x110] sm:$0xff]
        %v230 = vld [vmem:[%s167 + $0x118] sm:$0xff]
        %v231 = vld [vmem:[%s167 + $0x120] sm:$0xff]
        %v232 = vld [vmem:[%s167 + $0x128] sm:$0xff]
        %v233 = vld [vmem:[%s167 + $0x130] sm:$0xff]
        %v234 = vld [vmem:[%s167 + $0x138] sm:$0xff]
        %v235 = vld [vmem:[%s167 + $0x140] sm:$0xff]
        %v236 = vld [vmem:[%s167 + $0x148] sm:$0xff]
        %v237 = vld [vmem:[%s167 + $0x150] sm:$0xff]
        %v238 = vld [vmem:[%s167 + $0x158] sm:$0xff]
        %v239 = vld [vmem:[%s167 + $0x160] sm:$0xff]
        %v240 = vld [vmem:[%s167 + $0x168] sm:$0xff]
        %v241 = vld [vmem:[%s167 + $0x170] sm:$0xff]
        %v242 = vld [vmem:[%s167 + $0x178] sm:$0xff]
        %p243 = scmp.eq.s32.totalorder %s24, 0
        // Predicated region
        $region37: #{tpu_custom_call.1} parent=27 // pred_check
          %p244 = pneg %p243
        $region38: #{tpu_custom_call.1} parent=27 // pred_check_branch
          %246 = sbr.rel (%p244) target = $region40
        $region39: #{tpu_custom_call.1} parent=27 // pred_region
          %v247 = vld [vmem:[#allocation7] sm:$0xff]
          %v248 = vld [vmem:[#allocation7 + $0x8] sm:$0xff]
          %v249 = vld [vmem:[#allocation7 + $0x10] sm:$0xff]
          %v250 = vld [vmem:[#allocation7 + $0x18] sm:$0xff]
          %v251 = vld [vmem:[#allocation7 + $0x20] sm:$0xff]
          %v252 = vld [vmem:[#allocation7 + $0x28] sm:$0xff]
          %v253 = vld [vmem:[#allocation7 + $0x30] sm:$0xff]
          %v254 = vld [vmem:[#allocation7 + $0x38] sm:$0xff]
          %v255 = vld [vmem:[#allocation7 + $0x40] sm:$0xff]
          %v256 = vld [vmem:[#allocation7 + $0x48] sm:$0xff]
          %v257 = vld [vmem:[#allocation7 + $0x50] sm:$0xff]
          %v258 = vld [vmem:[#allocation7 + $0x58] sm:$0xff]
          %v259 = vld [vmem:[#allocation7 + $0x60] sm:$0xff]
          %v260 = vld [vmem:[#allocation7 + $0x68] sm:$0xff]
          %v261 = vld [vmem:[#allocation7 + $0x70] sm:$0xff]
          %v262 = vld [vmem:[#allocation7 + $0x78] sm:$0xff]
          %v263 = vld [vmem:[#allocation7 + $0x80] sm:$0xff]
          %v264 = vld [vmem:[#allocation7 + $0x88] sm:$0xff]
          %v265 = vld [vmem:[#allocation7 + $0x90] sm:$0xff]
          %v266 = vld [vmem:[#allocation7 + $0x98] sm:$0xff]
          %v267 = vld [vmem:[#allocation7 + $0xa0] sm:$0xff]
          %v268 = vld [vmem:[#allocation7 + $0xa8] sm:$0xff]
          %v269 = vld [vmem:[#allocation7 + $0xb0] sm:$0xff]
          %v270 = vld [vmem:[#allocation7 + $0xb8] sm:$0xff]
          %v271 = vld [vmem:[#allocation7 + $0xc0] sm:$0xff]
          %v272 = vld [vmem:[#allocation7 + $0xc8] sm:$0xff]
          %v273 = vld [vmem:[#allocation7 + $0xd0] sm:$0xff]
          %v274 = vld [vmem:[#allocation7 + $0xd8] sm:$0xff]
          %v275 = vld [vmem:[#allocation7 + $0xe0] sm:$0xff]
          %v276 = vld [vmem:[#allocation7 + $0xe8] sm:$0xff]
          %v277 = vld [vmem:[#allocation7 + $0xf0] sm:$0xff]
          %v278 = vld [vmem:[#allocation7 + $0xf8] sm:$0xff]
          %v279 = vld [vmem:[#allocation7 + $0x100] sm:$0xff]
          %v280 = vld [vmem:[#allocation7 + $0x108] sm:$0xff]
          %v281 = vld [vmem:[#allocation7 + $0x110] sm:$0xff]
          %v282 = vld [vmem:[#allocation7 + $0x118] sm:$0xff]
          %v283 = vld [vmem:[#allocation7 + $0x120] sm:$0xff]
          %v284 = vld [vmem:[#allocation7 + $0x128] sm:$0xff]
          %v285 = vld [vmem:[#allocation7 + $0x130] sm:$0xff]
          %v286 = vld [vmem:[#allocation7 + $0x138] sm:$0xff]
          %v287 = vld [vmem:[#allocation7 + $0x140] sm:$0xff]
          %v288 = vld [vmem:[#allocation7 + $0x148] sm:$0xff]
          %v289 = vld [vmem:[#allocation7 + $0x150] sm:$0xff]
          %v290 = vld [vmem:[#allocation7 + $0x158] sm:$0xff]
          %v291 = vld [vmem:[#allocation7 + $0x160] sm:$0xff]
          %v292 = vld [vmem:[#allocation7 + $0x168] sm:$0xff]
          %v293 = vld [vmem:[#allocation7 + $0x170] sm:$0xff]
          %v294 = vld [vmem:[#allocation7 + $0x178] sm:$0xff]
          %295 = vmatprep.subr.mxu0 0.0
          %296 = vmatpush1.msra.mxu0 %v262
          %297 = vmatprep.subr.mxu0 0.0
          %298 = vmatpush1.msra.mxu0 %v261
          %299 = vmatprep.subr.mxu0 0.0
          %300 = vmatpush1.msra.mxu0 %v260
          %301 = vmatprep.subr.mxu0 0.0
          %302 = vmatpush1.msra.mxu0 %v259
          %303 = vmatprep.subr.mxu0 0.0
          %304 = vmatpush1.msra.mxu0 %v258
          %305 = vmatprep.subr.mxu0 0.0
          %306 = vmatpush1.msra.mxu0 %v257
          %307 = vmatprep.subr.mxu0 0.0
          %308 = vmatpush1.msra.mxu0 %v256
          %309 = vmatprep.subr.mxu0 0.0
          %310 = vmatpush1.msra.mxu0 %v255
          %311 = vmatprep.subr.mxu0 0.0
          %312 = vmatpush1.msra.mxu0 %v254
          %313 = vmatprep.subr.mxu0 0.0
          %314 = vmatpush1.msra.mxu0 %v253
          %315 = vmatprep.subr.mxu0 0.0
          %316 = vmatpush1.msra.mxu0 %v252
          %317 = vmatprep.subr.mxu0 0.0
          %318 = vmatpush1.msra.mxu0 %v251
          %319 = vmatprep.subr.mxu0 0.0
          %320 = vmatpush1.msra.mxu0 %v250
          %321 = vmatprep.subr.mxu0 0.0
          %322 = vmatpush1.msra.mxu0 %v249
          %323 = vmatprep.subr.mxu0 0.0
          %324 = vmatpush1.msra.mxu0 %v248
          %325 = vmatprep.subr.mxu0 0.0
          %326 = vmatpush1.msra.mxu0 %v247
          %327 = vmatprep.subr.mxu0 0.0
          %328 = vmatpush2.msra.mxu0 %v278
          %329 = vmatprep.subr.mxu0 0.0
          %330 = vmatpush2.msra.mxu0 %v277
          %331 = vmatprep.subr.mxu0 0.0
          %332 = vmatpush2.msra.mxu0 %v276
          %333 = vmatprep.subr.mxu0 0.0
          %334 = vmatpush2.msra.mxu0 %v275
          %335 = vmatprep.subr.mxu0 0.0
          %336 = vmatpush2.msra.mxu0 %v274
          %337 = vmatprep.subr.mxu0 0.0
          %338 = vmatpush2.msra.mxu0 %v273
          %339 = vmatprep.subr.mxu0 0.0
          %340 = vmatpush2.msra.mxu0 %v272
          %341 = vmatprep.subr.mxu0 0.0
          %342 = vmatpush2.msra.mxu0 %v271
          %343 = vmatprep.subr.mxu0 0.0
          %344 = vmatpush2.msra.mxu0 %v270
          %345 = vmatprep.subr.mxu0 0.0
          %346 = vmatpush2.msra.mxu0 %v269
          %347 = vmatprep.subr.mxu0 0.0
          %348 = vmatpush2.msra.mxu0 %v268
          %349 = vmatprep.subr.mxu0 0.0
          %350 = vmatpush2.msra.mxu0 %v267
          %351 = vmatprep.subr.mxu0 0.0
          %352 = vmatpush2.msra.mxu0 %v266
          %353 = vmatprep.subr.mxu0 0.0
          %354 = vmatpush2.msra.mxu0 %v265
          %355 = vmatprep.subr.mxu0 0.0
          %356 = vmatpush2.msra.mxu0 %v264
          %357 = vmatprep.subr.mxu0 0.0
          %358 = vmatpush2.msra.mxu0 %v263
          %359 = vmatprep.mubr.f32.mxu0 %v196
          %360 = vmatmul.mubr.f32.gmra.mxu0 %v195
          %v361 = vpop.f32.mrf.mxu0
          %v362 = vadd.f32 0.0, %v361
          %v363 = vpop.f32.mrf.mxu0
          %364 = vmatprep.mubr.f32.mxu0 %v199
          %365 = vmatmul.mubr.f32.gmra.mxu0 %v198
          %v366 = vpop.f32.mrf.mxu0
          %v367 = vadd.f32 0.0, %v366
          %v368 = vpop.f32.mrf.mxu0
          %369 = vmatprep.mubr.f32.mxu0 %v202
          %370 = vmatmul.mubr.f32.gmra.mxu0 %v201
          %v371 = vpop.f32.mrf.mxu0
          %v372 = vadd.f32 0.0, %v371
          %v373 = vpop.f32.mrf.mxu0
          %374 = vmatprep.mubr.f32.mxu0 %v205
          %375 = vmatmul.mubr.f32.gmra.mxu0 %v204
          %v376 = vpop.f32.mrf.mxu0
          %v377 = vadd.f32 0.0, %v376
          %v378 = vpop.f32.mrf.mxu0
          %379 = vmatprep.mubr.f32.mxu0 %v208
          %380 = vmatmul.mubr.f32.gmra.mxu0 %v207
          %v381 = vpop.f32.mrf.mxu0
          %v382 = vadd.f32 0.0, %v381
          %v383 = vpop.f32.mrf.mxu0
          %384 = vmatprep.mubr.f32.mxu0 %v211
          %385 = vmatmul.mubr.f32.gmra.mxu0 %v210
          %v386 = vpop.f32.mrf.mxu0
          %v387 = vadd.f32 0.0, %v386
          %v388 = vpop.f32.mrf.mxu0
          %389 = vmatprep.mubr.f32.mxu0 %v214
          %390 = vmatmul.mubr.f32.gmra.mxu0 %v213
          %v391 = vpop.f32.mrf.mxu0
          %v392 = vadd.f32 0.0, %v391
          %v393 = vpop.f32.mrf.mxu0
          %394 = vmatprep.mubr.f32.mxu0 %v217
          %395 = vmatmul.mubr.f32.gmra.mxu0 %v216
          %v396 = vpop.f32.mrf.mxu0
          %v397 = vadd.f32 0.0, %v396
          %v398 = vpop.f32.mrf.mxu0
          %399 = vmatprep.mubr.f32.mxu0 %v220
          %400 = vmatmul.mubr.f32.gmra.mxu0 %v219
          %v401 = vpop.f32.mrf.mxu0
          %v402 = vadd.f32 0.0, %v401
          %v403 = vpop.f32.mrf.mxu0
          %404 = vmatprep.mubr.f32.mxu0 %v223
          %405 = vmatmul.mubr.f32.gmra.mxu0 %v222
          %v406 = vpop.f32.mrf.mxu0
          %v407 = vadd.f32 0.0, %v406
          %v408 = vpop.f32.mrf.mxu0
          %409 = vmatprep.mubr.f32.mxu0 %v226
          %410 = vmatmul.mubr.f32.gmra.mxu0 %v225
          %v411 = vpop.f32.mrf.mxu0
          %v412 = vadd.f32 0.0, %v411
          %v413 = vpop.f32.mrf.mxu0
          %414 = vmatprep.mubr.f32.mxu0 %v229
          %415 = vmatmul.mubr.f32.gmra.mxu0 %v228
          %v416 = vpop.f32.mrf.mxu0
          %v417 = vadd.f32 0.0, %v416
          %v418 = vpop.f32.mrf.mxu0
          %419 = vmatprep.mubr.f32.mxu0 %v232
          %420 = vmatmul.mubr.f32.gmra.mxu0 %v231
          %v421 = vpop.f32.mrf.mxu0
          %v422 = vadd.f32 0.0, %v421
          %v423 = vpop.f32.mrf.mxu0
          %424 = vmatprep.mubr.f32.mxu0 %v235
          %425 = vmatmul.mubr.f32.gmra.mxu0 %v234
          %v426 = vpop.f32.mrf.mxu0
          %v427 = vadd.f32 0.0, %v426
          %v428 = vpop.f32.mrf.mxu0
          %429 = vmatprep.mubr.f32.mxu0 %v238
          %430 = vmatmul.mubr.f32.gmra.mxu0 %v237
          %v431 = vpop.f32.mrf.mxu0
          %v432 = vadd.f32 0.0, %v431
          %v433 = vpop.f32.mrf.mxu0
          %434 = vmatprep.mubr.f32.mxu0 %v241
          %435 = vmatmul.mubr.f32.gmra.mxu0 %v240
          %v436 = vpop.f32.mrf.mxu0
          %v437 = vadd.f32 0.0, %v436
          %v438 = vpop.f32.mrf.mxu0
          %439 = vdwg.mxu0
          %440 = vmatprep.subr.mxu0 0.0
          %441 = vmatpush1.msra.mxu0 %v294
          %442 = vmatprep.subr.mxu0 0.0
          %443 = vmatpush1.msra.mxu0 %v293
          %444 = vmatprep.subr.mxu0 0.0
          %445 = vmatpush1.msra.mxu0 %v292
          %446 = vmatprep.subr.mxu0 0.0
          %447 = vmatpush1.msra.mxu0 %v291
          %448 = vmatprep.subr.mxu0 0.0
          %449 = vmatpush1.msra.mxu0 %v290
          %450 = vmatprep.subr.mxu0 0.0
          %451 = vmatpush1.msra.mxu0 %v289
          %452 = vmatprep.subr.mxu0 0.0
          %453 = vmatpush1.msra.mxu0 %v288
          %454 = vmatprep.subr.mxu0 0.0
          %455 = vmatpush1.msra.mxu0 %v287
          %456 = vmatprep.subr.mxu0 0.0
          %457 = vmatpush1.msra.mxu0 %v286
          %458 = vmatprep.subr.mxu0 0.0
          %459 = vmatpush1.msra.mxu0 %v285
          %460 = vmatprep.subr.mxu0 0.0
          %461 = vmatpush1.msra.mxu0 %v284
          %462 = vmatprep.subr.mxu0 0.0
          %463 = vmatpush1.msra.mxu0 %v283
          %464 = vmatprep.subr.mxu0 0.0
          %465 = vmatpush1.msra.mxu0 %v282
          %466 = vmatprep.subr.mxu0 0.0
          %467 = vmatpush1.msra.mxu0 %v281
          %468 = vmatprep.subr.mxu0 0.0
          %469 = vmatpush1.msra.mxu0 %v280
          %470 = vmatprep.subr.mxu0 0.0
          %471 = vmatpush1.msra.mxu0 %v279
          %472 = vmatprep.subr.mxu0 0.0
          %473 = vmatpush2.msra.mxu0 0.0
          %474 = vmatprep.subr.mxu0 0.0
          %475 = vmatpush2.msra.mxu0 0.0
          %476 = vmatprep.subr.mxu0 0.0
          %477 = vmatpush2.msra.mxu0 0.0
          %478 = vmatprep.subr.mxu0 0.0
          %479 = vmatpush2.msra.mxu0 0.0
          %480 = vmatprep.subr.mxu0 0.0
          %481 = vmatpush2.msra.mxu0 0.0
          %482 = vmatprep.subr.mxu0 0.0
          %483 = vmatpush2.msra.mxu0 0.0
          %484 = vmatprep.subr.mxu0 0.0
          %485 = vmatpush2.msra.mxu0 0.0
          %486 = vmatprep.subr.mxu0 0.0
          %487 = vmatpush2.msra.mxu0 0.0
          %488 = vmatprep.subr.mxu0 0.0
          %489 = vmatpush2.msra.mxu0 0.0
          %490 = vmatprep.subr.mxu0 0.0
          %491 = vmatpush2.msra.mxu0 0.0
          %492 = vmatprep.subr.mxu0 0.0
          %493 = vmatpush2.msra.mxu0 0.0
          %494 = vmatprep.subr.mxu0 0.0
          %495 = vmatpush2.msra.mxu0 0.0
          %496 = vmatprep.subr.mxu0 0.0
          %497 = vmatpush2.msra.mxu0 0.0
          %498 = vmatprep.subr.mxu0 0.0
          %499 = vmatpush2.msra.mxu0 0.0
          %500 = vmatprep.subr.mxu0 0.0
          %501 = vmatpush2.msra.mxu0 0.0
          %502 = vmatprep.subr.mxu0 0.0
          %503 = vmatpush2.msra.mxu0 0.0
          %504 = vmatprep.mubr.f32.mxu0 0.0
          %505 = vmatmul.mubr.f32.gmra.mxu0 %v197
          %v506 = vpop.f32.mrf.mxu0
          %v507 = vadd.f32 %v362, %v506
          %v508 = vpop.f32.mrf.mxu0
          %509 = vmatprep.mubr.f32.mxu0 0.0
          %510 = vmatmul.mubr.f32.gmra.mxu0 %v200
          %v511 = vpop.f32.mrf.mxu0
          %v512 = vadd.f32 %v367, %v511
          %v513 = vpop.f32.mrf.mxu0
          %514 = vmatprep.mubr.f32.mxu0 0.0
          %515 = vmatmul.mubr.f32.gmra.mxu0 %v203
          %v516 = vpop.f32.mrf.mxu0
          %v517 = vadd.f32 %v372, %v516
          %v518 = vpop.f32.mrf.mxu0
          %519 = vmatprep.mubr.f32.mxu0 0.0
          %520 = vmatmul.mubr.f32.gmra.mxu0 %v206
          %v521 = vpop.f32.mrf.mxu0
          %v522 = vadd.f32 %v377, %v521
          %v523 = vpop.f32.mrf.mxu0
          %524 = vmatprep.mubr.f32.mxu0 0.0
          %525 = vmatmul.mubr.f32.gmra.mxu0 %v209
          %v526 = vpop.f32.mrf.mxu0
          %v527 = vadd.f32 %v382, %v526
          %v528 = vpop.f32.mrf.mxu0
          %529 = vmatprep.mubr.f32.mxu0 0.0
          %530 = vmatmul.mubr.f32.gmra.mxu0 %v212
          %v531 = vpop.f32.mrf.mxu0
          %v532 = vadd.f32 %v387, %v531
          %v533 = vpop.f32.mrf.mxu0
          %534 = vmatprep.mubr.f32.mxu0 0.0
          %535 = vmatmul.mubr.f32.gmra.mxu0 %v215
          %v536 = vpop.f32.mrf.mxu0
          %v537 = vadd.f32 %v392, %v536
          %v538 = vpop.f32.mrf.mxu0
          %539 = vmatprep.mubr.f32.mxu0 0.0
          %540 = vmatmul.mubr.f32.gmra.mxu0 %v218
          %v541 = vpop.f32.mrf.mxu0
          %v542 = vadd.f32 %v397, %v541
          %v543 = vpop.f32.mrf.mxu0
          %544 = vmatprep.mubr.f32.mxu0 0.0
          %545 = vmatmul.mubr.f32.gmra.mxu0 %v221
          %v546 = vpop.f32.mrf.mxu0
          %v547 = vadd.f32 %v402, %v546
          %v548 = vpop.f32.mrf.mxu0
          %549 = vmatprep.mubr.f32.mxu0 0.0
          %550 = vmatmul.mubr.f32.gmra.mxu0 %v224
          %v551 = vpop.f32.mrf.mxu0
          %v552 = vadd.f32 %v407, %v551
          %v553 = vpop.f32.mrf.mxu0
          %554 = vmatprep.mubr.f32.mxu0 0.0
          %555 = vmatmul.mubr.f32.gmra.mxu0 %v227
          %v556 = vpop.f32.mrf.mxu0
          %v557 = vadd.f32 %v412, %v556
          %v558 = vpop.f32.mrf.mxu0
          %559 = vmatprep.mubr.f32.mxu0 0.0
          %560 = vmatmul.mubr.f32.gmra.mxu0 %v230
          %v561 = vpop.f32.mrf.mxu0
          %v562 = vadd.f32 %v417, %v561
          %v563 = vpop.f32.mrf.mxu0
          %564 = vmatprep.mubr.f32.mxu0 0.0
          %565 = vmatmul.mubr.f32.gmra.mxu0 %v233
          %v566 = vpop.f32.mrf.mxu0
          %v567 = vadd.f32 %v422, %v566
          %v568 = vpop.f32.mrf.mxu0
          %569 = vmatprep.mubr.f32.mxu0 0.0
          %570 = vmatmul.mubr.f32.gmra.mxu0 %v236
          %v571 = vpop.f32.mrf.mxu0
          %v572 = vadd.f32 %v427, %v571
          %v573 = vpop.f32.mrf.mxu0
          %574 = vmatprep.mubr.f32.mxu0 0.0
          %575 = vmatmul.mubr.f32.gmra.mxu0 %v239
          %v576 = vpop.f32.mrf.mxu0
          %v577 = vadd.f32 %v432, %v576
          %v578 = vpop.f32.mrf.mxu0
          %579 = vmatprep.mubr.f32.mxu0 0.0
          %580 = vmatmul.mubr.f32.gmra.mxu0 %v242
          %v581 = vpop.f32.mrf.mxu0
          %v582 = vadd.f32 %v437, %v581
          %v583 = vpop.f32.mrf.mxu0
          %584 = vdwg.mxu0
          %585 = vst [vmem:[%s191] sm:$0xff] %v507
          %586 = vst [vmem:[%s191 + $0x8] sm:$0xff] %v512
          %587 = vst [vmem:[%s191 + $0x10] sm:$0xff] %v517
          %588 = vst [vmem:[%s191 + $0x18] sm:$0xff] %v522
          %589 = vst [vmem:[%s191 + $0x20] sm:$0xff] %v527
          %590 = vst [vmem:[%s191 + $0x28] sm:$0xff] %v532
          %591 = vst [vmem:[%s191 + $0x30] sm:$0xff] %v537
          %592 = vst [vmem:[%s191 + $0x38] sm:$0xff] %v542
          %593 = vst [vmem:[%s191 + $0x40] sm:$0xff] %v547
          %594 = vst [vmem:[%s191 + $0x48] sm:$0xff] %v552
          %595 = vst [vmem:[%s191 + $0x50] sm:$0xff] %v557
          %596 = vst [vmem:[%s191 + $0x58] sm:$0xff] %v562
          %597 = vst [vmem:[%s191 + $0x60] sm:$0xff] %v567
          %598 = vst [vmem:[%s191 + $0x68] sm:$0xff] %v572
          %599 = vst [vmem:[%s191 + $0x70] sm:$0xff] %v577
          %600 = vst [vmem:[%s191 + $0x78] sm:$0xff] %v582
          %s601 = scalar_lea.vmem [#allocation2], %s194
          %602 = vst [vmem:[%s601] sm:$0xff] %v507
          %603 = vst [vmem:[%s601 + $0x8] sm:$0xff] %v512
          %604 = vst [vmem:[%s601 + $0x10] sm:$0xff] %v517
          %605 = vst [vmem:[%s601 + $0x18] sm:$0xff] %v522
          %606 = vst [vmem:[%s601 + $0x20] sm:$0xff] %v527
          %607 = vst [vmem:[%s601 + $0x28] sm:$0xff] %v532
          %608 = vst [vmem:[%s601 + $0x30] sm:$0xff] %v537
          %609 = vst [vmem:[%s601 + $0x38] sm:$0xff] %v542
          %610 = vst [vmem:[%s601 + $0x40] sm:$0xff] %v547
          %611 = vst [vmem:[%s601 + $0x48] sm:$0xff] %v552
          %612 = vst [vmem:[%s601 + $0x50] sm:$0xff] %v557
          %613 = vst [vmem:[%s601 + $0x58] sm:$0xff] %v562
          %614 = vst [vmem:[%s601 + $0x60] sm:$0xff] %v567
          %615 = vst [vmem:[%s601 + $0x68] sm:$0xff] %v572
          %616 = vst [vmem:[%s601 + $0x70] sm:$0xff] %v577
          %617 = vst [vmem:[%s601 + $0x78] sm:$0xff] %v582
        $region40: #{tpu_custom_call.1} parent=27 // pred_fallthru
          _
        %p618 = scmp.eq.s32.totalorder %s24, 1
        // Predicated region
        $region41: #{tpu_custom_call.1} parent=27 // pred_check
          %p619 = pneg %p618
        $region42: #{tpu_custom_call.1} parent=27 // pred_check_branch
          %621 = sbr.rel (%p619) target = $region44
        $region43: #{tpu_custom_call.1} parent=27 // pred_region
          %v622 = vld [vmem:[#allocation2] sm:$0xff]
          %v623 = vld [vmem:[#allocation2 + $0x8] sm:$0xff]
          %v624 = vld [vmem:[#allocation2 + $0x10] sm:$0xff]
          %v625 = vld [vmem:[#allocation2 + $0x18] sm:$0xff]
          %v626 = vld [vmem:[#allocation2 + $0x20] sm:$0xff]
          %v627 = vld [vmem:[#allocation2 + $0x28] sm:$0xff]
          %v628 = vld [vmem:[#allocation2 + $0x30] sm:$0xff]
          %v629 = vld [vmem:[#allocation2 + $0x38] sm:$0xff]
          %v630 = vld [vmem:[#allocation2 + $0x40] sm:$0xff]
          %v631 = vld [vmem:[#allocation2 + $0x48] sm:$0xff]
          %v632 = vld [vmem:[#allocation2 + $0x50] sm:$0xff]
          %v633 = vld [vmem:[#allocation2 + $0x58] sm:$0xff]
          %v634 = vld [vmem:[#allocation2 + $0x60] sm:$0xff]
          %v635 = vld [vmem:[#allocation2 + $0x68] sm:$0xff]
          %v636 = vld [vmem:[#allocation2 + $0x70] sm:$0xff]
          %v637 = vld [vmem:[#allocation2 + $0x78] sm:$0xff]
          %v638 = vld [vmem:[#allocation2 + $0x80] sm:$0xff]
          %v639 = vld [vmem:[#allocation2 + $0x88] sm:$0xff]
          %v640 = vld [vmem:[#allocation2 + $0x90] sm:$0xff]
          %v641 = vld [vmem:[#allocation2 + $0x98] sm:$0xff]
          %v642 = vld [vmem:[#allocation2 + $0xa0] sm:$0xff]
          %v643 = vld [vmem:[#allocation2 + $0xa8] sm:$0xff]
          %v644 = vld [vmem:[#allocation2 + $0xb0] sm:$0xff]
          %v645 = vld [vmem:[#allocation2 + $0xb8] sm:$0xff]
          %v646 = vld [vmem:[#allocation2 + $0xc0] sm:$0xff]
          %v647 = vld [vmem:[#allocation2 + $0xc8] sm:$0xff]
          %v648 = vld [vmem:[#allocation2 + $0xd0] sm:$0xff]
          %v649 = vld [vmem:[#allocation2 + $0xd8] sm:$0xff]
          %v650 = vld [vmem:[#allocation2 + $0xe0] sm:$0xff]
          %v651 = vld [vmem:[#allocation2 + $0xe8] sm:$0xff]
          %v652 = vld [vmem:[#allocation2 + $0xf0] sm:$0xff]
          %v653 = vld [vmem:[#allocation2 + $0xf8] sm:$0xff]
          %v654 = vld [vmem:[#allocation2 + $0x100] sm:$0xff]
          %v655 = vld [vmem:[#allocation2 + $0x108] sm:$0xff]
          %v656 = vld [vmem:[#allocation2 + $0x110] sm:$0xff]
          %v657 = vld [vmem:[#allocation2 + $0x118] sm:$0xff]
          %v658 = vld [vmem:[#allocation2 + $0x120] sm:$0xff]
          %v659 = vld [vmem:[#allocation2 + $0x128] sm:$0xff]
          %v660 = vld [vmem:[#allocation2 + $0x130] sm:$0xff]
          %v661 = vld [vmem:[#allocation2 + $0x138] sm:$0xff]
          %v662 = vld [vmem:[#allocation2 + $0x140] sm:$0xff]
          %v663 = vld [vmem:[#allocation2 + $0x148] sm:$0xff]
          %v664 = vld [vmem:[#allocation2 + $0x150] sm:$0xff]
          %v665 = vld [vmem:[#allocation2 + $0x158] sm:$0xff]
          %v666 = vld [vmem:[#allocation2 + $0x160] sm:$0xff]
          %v667 = vld [vmem:[#allocation2 + $0x168] sm:$0xff]
          %v668 = vld [vmem:[#allocation2 + $0x170] sm:$0xff]
          %v669 = vld [vmem:[#allocation2 + $0x178] sm:$0xff]
          %670 = vmatprep.subr.mxu0 0.0
          %671 = vmatpush1.msra.mxu0 %v637
          %672 = vmatprep.subr.mxu0 0.0
          %673 = vmatpush1.msra.mxu0 %v636
          %674 = vmatprep.subr.mxu0 0.0
          %675 = vmatpush1.msra.mxu0 %v635
          %676 = vmatprep.subr.mxu0 0.0
          %677 = vmatpush1.msra.mxu0 %v634
          %678 = vmatprep.subr.mxu0 0.0
          %679 = vmatpush1.msra.mxu0 %v633
          %680 = vmatprep.subr.mxu0 0.0
          %681 = vmatpush1.msra.mxu0 %v632
          %682 = vmatprep.subr.mxu0 0.0
          %683 = vmatpush1.msra.mxu0 %v631
          %684 = vmatprep.subr.mxu0 0.0
          %685 = vmatpush1.msra.mxu0 %v630
          %686 = vmatprep.subr.mxu0 0.0
          %687 = vmatpush1.msra.mxu0 %v629
          %688 = vmatprep.subr.mxu0 0.0
          %689 = vmatpush1.msra.mxu0 %v628
          %690 = vmatprep.subr.mxu0 0.0
          %691 = vmatpush1.msra.mxu0 %v627
          %692 = vmatprep.subr.mxu0 0.0
          %693 = vmatpush1.msra.mxu0 %v626
          %694 = vmatprep.subr.mxu0 0.0
          %695 = vmatpush1.msra.mxu0 %v625
          %696 = vmatprep.subr.mxu0 0.0
          %697 = vmatpush1.msra.mxu0 %v624
          %698 = vmatprep.subr.mxu0 0.0
          %699 = vmatpush1.msra.mxu0 %v623
          %700 = vmatprep.subr.mxu0 0.0
          %701 = vmatpush1.msra.mxu0 %v622
          %702 = vmatprep.subr.mxu0 0.0
          %703 = vmatpush2.msra.mxu0 %v653
          %704 = vmatprep.subr.mxu0 0.0
          %705 = vmatpush2.msra.mxu0 %v652
          %706 = vmatprep.subr.mxu0 0.0
          %707 = vmatpush2.msra.mxu0 %v651
          %708 = vmatprep.subr.mxu0 0.0
          %709 = vmatpush2.msra.mxu0 %v650
          %710 = vmatprep.subr.mxu0 0.0
          %711 = vmatpush2.msra.mxu0 %v649
          %712 = vmatprep.subr.mxu0 0.0
          %713 = vmatpush2.msra.mxu0 %v648
          %714 = vmatprep.subr.mxu0 0.0
          %715 = vmatpush2.msra.mxu0 %v647
          %716 = vmatprep.subr.mxu0 0.0
          %717 = vmatpush2.msra.mxu0 %v646
          %718 = vmatprep.subr.mxu0 0.0
          %719 = vmatpush2.msra.mxu0 %v645
          %720 = vmatprep.subr.mxu0 0.0
          %721 = vmatpush2.msra.mxu0 %v644
          %722 = vmatprep.subr.mxu0 0.0
          %723 = vmatpush2.msra.mxu0 %v643
          %724 = vmatprep.subr.mxu0 0.0
          %725 = vmatpush2.msra.mxu0 %v642
          %726 = vmatprep.subr.mxu0 0.0
          %727 = vmatpush2.msra.mxu0 %v641
          %728 = vmatprep.subr.mxu0 0.0
          %729 = vmatpush2.msra.mxu0 %v640
          %730 = vmatprep.subr.mxu0 0.0
          %731 = vmatpush2.msra.mxu0 %v639
          %732 = vmatprep.subr.mxu0 0.0
          %733 = vmatpush2.msra.mxu0 %v638
          %734 = vmatprep.mubr.f32.mxu0 %v196
          %735 = vmatmul.mubr.f32.gmra.mxu0 %v195
          %v736 = vpop.f32.mrf.mxu0
          %v737 = vadd.f32 0.0, %v736
          %v738 = vpop.f32.mrf.mxu0
          %739 = vmatprep.mubr.f32.mxu0 %v199
          %740 = vmatmul.mubr.f32.gmra.mxu0 %v198
          %v741 = vpop.f32.mrf.mxu0
          %v742 = vadd.f32 0.0, %v741
          %v743 = vpop.f32.mrf.mxu0
          %744 = vmatprep.mubr.f32.mxu0 %v202
          %745 = vmatmul.mubr.f32.gmra.mxu0 %v201
          %v746 = vpop.f32.mrf.mxu0
          %v747 = vadd.f32 0.0, %v746
          %v748 = vpop.f32.mrf.mxu0
          %749 = vmatprep.mubr.f32.mxu0 %v205
          %750 = vmatmul.mubr.f32.gmra.mxu0 %v204
          %v751 = vpop.f32.mrf.mxu0
          %v752 = vadd.f32 0.0, %v751
          %v753 = vpop.f32.mrf.mxu0
          %754 = vmatprep.mubr.f32.mxu0 %v208
          %755 = vmatmul.mubr.f32.gmra.mxu0 %v207
          %v756 = vpop.f32.mrf.mxu0
          %v757 = vadd.f32 0.0, %v756
          %v758 = vpop.f32.mrf.mxu0
          %759 = vmatprep.mubr.f32.mxu0 %v211
          %760 = vmatmul.mubr.f32.gmra.mxu0 %v210
          %v761 = vpop.f32.mrf.mxu0
          %v762 = vadd.f32 0.0, %v761
          %v763 = vpop.f32.mrf.mxu0
          %764 = vmatprep.mubr.f32.mxu0 %v214
          %765 = vmatmul.mubr.f32.gmra.mxu0 %v213
          %v766 = vpop.f32.mrf.mxu0
          %v767 = vadd.f32 0.0, %v766
          %v768 = vpop.f32.mrf.mxu0
          %769 = vmatprep.mubr.f32.mxu0 %v217
          %770 = vmatmul.mubr.f32.gmra.mxu0 %v216
          %v771 = vpop.f32.mrf.mxu0
          %v772 = vadd.f32 0.0, %v771
          %v773 = vpop.f32.mrf.mxu0
          %774 = vmatprep.mubr.f32.mxu0 %v220
          %775 = vmatmul.mubr.f32.gmra.mxu0 %v219
          %v776 = vpop.f32.mrf.mxu0
          %v777 = vadd.f32 0.0, %v776
          %v778 = vpop.f32.mrf.mxu0
          %779 = vmatprep.mubr.f32.mxu0 %v223
          %780 = vmatmul.mubr.f32.gmra.mxu0 %v222
          %v781 = vpop.f32.mrf.mxu0
          %v782 = vadd.f32 0.0, %v781
          %v783 = vpop.f32.mrf.mxu0
          %784 = vmatprep.mubr.f32.mxu0 %v226
          %785 = vmatmul.mubr.f32.gmra.mxu0 %v225
          %v786 = vpop.f32.mrf.mxu0
          %v787 = vadd.f32 0.0, %v786
          %v788 = vpop.f32.mrf.mxu0
          %789 = vmatprep.mubr.f32.mxu0 %v229
          %790 = vmatmul.mubr.f32.gmra.mxu0 %v228
          %v791 = vpop.f32.mrf.mxu0
          %v792 = vadd.f32 0.0, %v791
          %v793 = vpop.f32.mrf.mxu0
          %794 = vmatprep.mubr.f32.mxu0 %v232
          %795 = vmatmul.mubr.f32.gmra.mxu0 %v231
          %v796 = vpop.f32.mrf.mxu0
          %v797 = vadd.f32 0.0, %v796
          %v798 = vpop.f32.mrf.mxu0
          %799 = vmatprep.mubr.f32.mxu0 %v235
          %800 = vmatmul.mubr.f32.gmra.mxu0 %v234
          %v801 = vpop.f32.mrf.mxu0
          %v802 = vadd.f32 0.0, %v801
          %v803 = vpop.f32.mrf.mxu0
          %804 = vmatprep.mubr.f32.mxu0 %v238
          %805 = vmatmul.mubr.f32.gmra.mxu0 %v237
          %v806 = vpop.f32.mrf.mxu0
          %v807 = vadd.f32 0.0, %v806
          %v808 = vpop.f32.mrf.mxu0
          %809 = vmatprep.mubr.f32.mxu0 %v241
          %810 = vmatmul.mubr.f32.gmra.mxu0 %v240
          %v811 = vpop.f32.mrf.mxu0
          %v812 = vadd.f32 0.0, %v811
          %v813 = vpop.f32.mrf.mxu0
          %814 = vdwg.mxu0
          %815 = vmatprep.subr.mxu0 0.0
          %816 = vmatpush1.msra.mxu0 %v669
          %817 = vmatprep.subr.mxu0 0.0
          %818 = vmatpush1.msra.mxu0 %v668
          %819 = vmatprep.subr.mxu0 0.0
          %820 = vmatpush1.msra.mxu0 %v667
          %821 = vmatprep.subr.mxu0 0.0
          %822 = vmatpush1.msra.mxu0 %v666
          %823 = vmatprep.subr.mxu0 0.0
          %824 = vmatpush1.msra.mxu0 %v665
          %825 = vmatprep.subr.mxu0 0.0
          %826 = vmatpush1.msra.mxu0 %v664
          %827 = vmatprep.subr.mxu0 0.0
          %828 = vmatpush1.msra.mxu0 %v663
          %829 = vmatprep.subr.mxu0 0.0
          %830 = vmatpush1.msra.mxu0 %v662
          %831 = vmatprep.subr.mxu0 0.0
          %832 = vmatpush1.msra.mxu0 %v661
          %833 = vmatprep.subr.mxu0 0.0
          %834 = vmatpush1.msra.mxu0 %v660
          %835 = vmatprep.subr.mxu0 0.0
          %836 = vmatpush1.msra.mxu0 %v659
          %837 = vmatprep.subr.mxu0 0.0
          %838 = vmatpush1.msra.mxu0 %v658
          %839 = vmatprep.subr.mxu0 0.0
          %840 = vmatpush1.msra.mxu0 %v657
          %841 = vmatprep.subr.mxu0 0.0
          %842 = vmatpush1.msra.mxu0 %v656
          %843 = vmatprep.subr.mxu0 0.0
          %844 = vmatpush1.msra.mxu0 %v655
          %845 = vmatprep.subr.mxu0 0.0
          %846 = vmatpush1.msra.mxu0 %v654
          %847 = vmatprep.subr.mxu0 0.0
          %848 = vmatpush2.msra.mxu0 0.0
          %849 = vmatprep.subr.mxu0 0.0
          %850 = vmatpush2.msra.mxu0 0.0
          %851 = vmatprep.subr.mxu0 0.0
          %852 = vmatpush2.msra.mxu0 0.0
          %853 = vmatprep.subr.mxu0 0.0
          %854 = vmatpush2.msra.mxu0 0.0
          %855 = vmatprep.subr.mxu0 0.0
          %856 = vmatpush2.msra.mxu0 0.0
          %857 = vmatprep.subr.mxu0 0.0
          %858 = vmatpush2.msra.mxu0 0.0
          %859 = vmatprep.subr.mxu0 0.0
          %860 = vmatpush2.msra.mxu0 0.0
          %861 = vmatprep.subr.mxu0 0.0
          %862 = vmatpush2.msra.mxu0 0.0
          %863 = vmatprep.subr.mxu0 0.0
          %864 = vmatpush2.msra.mxu0 0.0
          %865 = vmatprep.subr.mxu0 0.0
          %866 = vmatpush2.msra.mxu0 0.0
          %867 = vmatprep.subr.mxu0 0.0
          %868 = vmatpush2.msra.mxu0 0.0
          %869 = vmatprep.subr.mxu0 0.0
          %870 = vmatpush2.msra.mxu0 0.0
          %871 = vmatprep.subr.mxu0 0.0
          %872 = vmatpush2.msra.mxu0 0.0
          %873 = vmatprep.subr.mxu0 0.0
          %874 = vmatpush2.msra.mxu0 0.0
          %875 = vmatprep.subr.mxu0 0.0
          %876 = vmatpush2.msra.mxu0 0.0
          %877 = vmatprep.subr.mxu0 0.0
          %878 = vmatpush2.msra.mxu0 0.0
          %879 = vmatprep.mubr.f32.mxu0 0.0
          %880 = vmatmul.mubr.f32.gmra.mxu0 %v197
          %v881 = vpop.f32.mrf.mxu0
          %v882 = vadd.f32 %v737, %v881
          %v883 = vpop.f32.mrf.mxu0
          %884 = vmatprep.mubr.f32.mxu0 0.0
          %885 = vmatmul.mubr.f32.gmra.mxu0 %v200
          %v886 = vpop.f32.mrf.mxu0
          %v887 = vadd.f32 %v742, %v886
          %v888 = vpop.f32.mrf.mxu0
          %889 = vmatprep.mubr.f32.mxu0 0.0
          %890 = vmatmul.mubr.f32.gmra.mxu0 %v203
          %v891 = vpop.f32.mrf.mxu0
          %v892 = vadd.f32 %v747, %v891
          %v893 = vpop.f32.mrf.mxu0
          %894 = vmatprep.mubr.f32.mxu0 0.0
          %895 = vmatmul.mubr.f32.gmra.mxu0 %v206
          %v896 = vpop.f32.mrf.mxu0
          %v897 = vadd.f32 %v752, %v896
          %v898 = vpop.f32.mrf.mxu0
          %899 = vmatprep.mubr.f32.mxu0 0.0
          %900 = vmatmul.mubr.f32.gmra.mxu0 %v209
          %v901 = vpop.f32.mrf.mxu0
          %v902 = vadd.f32 %v757, %v901
          %v903 = vpop.f32.mrf.mxu0
          %904 = vmatprep.mubr.f32.mxu0 0.0
          %905 = vmatmul.mubr.f32.gmra.mxu0 %v212
          %v906 = vpop.f32.mrf.mxu0
          %v907 = vadd.f32 %v762, %v906
          %v908 = vpop.f32.mrf.mxu0
          %909 = vmatprep.mubr.f32.mxu0 0.0
          %910 = vmatmul.mubr.f32.gmra.mxu0 %v215
          %v911 = vpop.f32.mrf.mxu0
          %v912 = vadd.f32 %v767, %v911
          %v913 = vpop.f32.mrf.mxu0
          %914 = vmatprep.mubr.f32.mxu0 0.0
          %915 = vmatmul.mubr.f32.gmra.mxu0 %v218
          %v916 = vpop.f32.mrf.mxu0
          %v917 = vadd.f32 %v772, %v916
          %v918 = vpop.f32.mrf.mxu0
          %919 = vmatprep.mubr.f32.mxu0 0.0
          %920 = vmatmul.mubr.f32.gmra.mxu0 %v221
          %v921 = vpop.f32.mrf.mxu0
          %v922 = vadd.f32 %v777, %v921
          %v923 = vpop.f32.mrf.mxu0
          %924 = vmatprep.mubr.f32.mxu0 0.0
          %925 = vmatmul.mubr.f32.gmra.mxu0 %v224
          %v926 = vpop.f32.mrf.mxu0
          %v927 = vadd.f32 %v782, %v926
          %v928 = vpop.f32.mrf.mxu0
          %929 = vmatprep.mubr.f32.mxu0 0.0
          %930 = vmatmul.mubr.f32.gmra.mxu0 %v227
          %v931 = vpop.f32.mrf.mxu0
          %v932 = vadd.f32 %v787, %v931
          %v933 = vpop.f32.mrf.mxu0
          %934 = vmatprep.mubr.f32.mxu0 0.0
          %935 = vmatmul.mubr.f32.gmra.mxu0 %v230
          %v936 = vpop.f32.mrf.mxu0
          %v937 = vadd.f32 %v792, %v936
          %v938 = vpop.f32.mrf.mxu0
          %939 = vmatprep.mubr.f32.mxu0 0.0
          %940 = vmatmul.mubr.f32.gmra.mxu0 %v233
          %v941 = vpop.f32.mrf.mxu0
          %v942 = vadd.f32 %v797, %v941
          %v943 = vpop.f32.mrf.mxu0
          %944 = vmatprep.mubr.f32.mxu0 0.0
          %945 = vmatmul.mubr.f32.gmra.mxu0 %v236
          %v946 = vpop.f32.mrf.mxu0
          %v947 = vadd.f32 %v802, %v946
          %v948 = vpop.f32.mrf.mxu0
          %949 = vmatprep.mubr.f32.mxu0 0.0
          %950 = vmatmul.mubr.f32.gmra.mxu0 %v239
          %v951 = vpop.f32.mrf.mxu0
          %v952 = vadd.f32 %v807, %v951
          %v953 = vpop.f32.mrf.mxu0
          %954 = vmatprep.mubr.f32.mxu0 0.0
          %955 = vmatmul.mubr.f32.gmra.mxu0 %v242
          %v956 = vpop.f32.mrf.mxu0
          %v957 = vadd.f32 %v812, %v956
          %v958 = vpop.f32.mrf.mxu0
          %959 = vdwg.mxu0
          %v960 = vmul.f32 %v882, 2.0
          %v961 = vmul.f32 %v887, 2.0
          %v962 = vmul.f32 %v892, 2.0
          %v963 = vmul.f32 %v897, 2.0
          %v964 = vmul.f32 %v902, 2.0
          %v965 = vmul.f32 %v907, 2.0
          %v966 = vmul.f32 %v912, 2.0
          %v967 = vmul.f32 %v917, 2.0
          %v968 = vmul.f32 %v922, 2.0
          %v969 = vmul.f32 %v927, 2.0
          %v970 = vmul.f32 %v932, 2.0
          %v971 = vmul.f32 %v937, 2.0
          %v972 = vmul.f32 %v942, 2.0
          %v973 = vmul.f32 %v947, 2.0
          %v974 = vmul.f32 %v952, 2.0
          %v975 = vmul.f32 %v957, 2.0
          %s976 = scalar_lea.vmem [#allocation7], %s194
          %v977 = vld [vmem:[%s976] sm:$0xff]
          %v978 = vld [vmem:[%s976 + $0x8] sm:$0xff]
          %v979 = vld [vmem:[%s976 + $0x10] sm:$0xff]
          %v980 = vld [vmem:[%s976 + $0x18] sm:$0xff]
          %v981 = vld [vmem:[%s976 + $0x20] sm:$0xff]
          %v982 = vld [vmem:[%s976 + $0x28] sm:$0xff]
          %v983 = vld [vmem:[%s976 + $0x30] sm:$0xff]
          %v984 = vld [vmem:[%s976 + $0x38] sm:$0xff]
          %v985 = vld [vmem:[%s976 + $0x40] sm:$0xff]
          %v986 = vld [vmem:[%s976 + $0x48] sm:$0xff]
          %v987 = vld [vmem:[%s976 + $0x50] sm:$0xff]
          %v988 = vld [vmem:[%s976 + $0x58] sm:$0xff]
          %v989 = vld [vmem:[%s976 + $0x60] sm:$0xff]
          %v990 = vld [vmem:[%s976 + $0x68] sm:$0xff]
          %v991 = vld [vmem:[%s976 + $0x70] sm:$0xff]
          %v992 = vld [vmem:[%s976 + $0x78] sm:$0xff]
          %v993 = vsub.f32 %v960, %v977
          %v994 = vsub.f32 %v961, %v978
          %v995 = vsub.f32 %v962, %v979
          %v996 = vsub.f32 %v963, %v980
          %v997 = vsub.f32 %v964, %v981
          %v998 = vsub.f32 %v965, %v982
          %v999 = vsub.f32 %v966, %v983
          %v1000 = vsub.f32 %v967, %v984
          %v1001 = vsub.f32 %v968, %v985
          %v1002 = vsub.f32 %v969, %v986
          %v1003 = vsub.f32 %v970, %v987
          %v1004 = vsub.f32 %v971, %v988
          %v1005 = vsub.f32 %v972, %v989
          %v1006 = vsub.f32 %v973, %v990
          %v1007 = vsub.f32 %v974, %v991
          %v1008 = vsub.f32 %v975, %v992
          %1009 = vst [vmem:[%s191] sm:$0xff] %v993
          %1010 = vst [vmem:[%s191 + $0x8] sm:$0xff] %v994
          %1011 = vst [vmem:[%s191 + $0x10] sm:$0xff] %v995
          %1012 = vst [vmem:[%s191 + $0x18] sm:$0xff] %v996
          %1013 = vst [vmem:[%s191 + $0x20] sm:$0xff] %v997
          %1014 = vst [vmem:[%s191 + $0x28] sm:$0xff] %v998
          %1015 = vst [vmem:[%s191 + $0x30] sm:$0xff] %v999
          %1016 = vst [vmem:[%s191 + $0x38] sm:$0xff] %v1000
          %1017 = vst [vmem:[%s191 + $0x40] sm:$0xff] %v1001
          %1018 = vst [vmem:[%s191 + $0x48] sm:$0xff] %v1002
          %1019 = vst [vmem:[%s191 + $0x50] sm:$0xff] %v1003
          %1020 = vst [vmem:[%s191 + $0x58] sm:$0xff] %v1004
          %1021 = vst [vmem:[%s191 + $0x60] sm:$0xff] %v1005
          %1022 = vst [vmem:[%s191 + $0x68] sm:$0xff] %v1006
          %1023 = vst [vmem:[%s191 + $0x70] sm:$0xff] %v1007
          %1024 = vst [vmem:[%s191 + $0x78] sm:$0xff] %v1008
        $region44: #{tpu_custom_call.1} parent=27 // pred_fallthru
          _
        %s1025 = sand.u32 %s89, 1
        %s1026 = scalar_lea.sflag [#allocation6], %s1025
        %s1027 = sand.u32 %s89, 1
        %s1028 = smul.addr %s1027, 128
        %s1029 = scalar_lea.vmem [#allocation9], %s1028
        // Predicated region
        $region45: #{tpu_custom_call.1} parent=27 // pred_check
          %p1030 = pneg %p99
        $region46: #{tpu_custom_call.1} parent=27 // pred_check_branch
          %1032 = sbr.rel (%p1030) target = $region48
        $region47: #{tpu_custom_call.1} parent=27 // pred_region
          %s1033 = smul.u32 16, %s25
          %s1035 = ssub.s32 2048, 2048
          %1036 = vsyncadd %s1026, %s1035
          %s1037 = smul.addr %s1033, 2
          %s1038 = sadd.s32 %s24, %s1037
          %s1039 = smul.addr %s1038, 128
          %s1040 = scalar_lea.hbm %s2, %s1039
          %s1041 = sshll.u32 %s1029, 4
          %s1042 = int_to_ptr.vmem [resolvable:$true] %s1041
          %1047 = dma.vmem_to_hbm [thread:$0]  %s1042, 2048, %s1040, %s1026, 128, 256, 8
        $region48: #{tpu_custom_call.1} parent=27 // pred_fallthru
          _
      $region28: #{tpu_custom_call.1} parent=5 // pred_fallthru
        _
      %p1048 = scmp.le.s32.totalorder 2, %s15
      // Predicated region
      $region49: #{tpu_custom_call.1} parent=5 // pred_check
        %p1049 = pneg %p1048
      $region50: #{tpu_custom_call.1} parent=5 // pred_check_branch
        %1051 = sbr.rel (%p1049) target = $region52
      $region51: #{tpu_custom_call.1} parent=5 // pred_region
        %s1052 = ssub.s32 %s15, 2
        // Predicated region
        $region53: #{tpu_custom_call.1} parent=51 // pred_check
          %p1053 = pneg %p105
        $region54: #{tpu_custom_call.1} parent=51 // pred_check_branch
          %1055 = sbr.rel (%p1053) target = $region56
        $region55: #{tpu_custom_call.1} parent=51 // pred_region
          %s1056 = sand.u32 %s90, 1
          %s1057 = scalar_lea.sflag [#allocation6], %s1056
          %s1058 = sand.u32 %s90, 1
          %s1059 = smul.addr %s1058, 128
          %s1060 = scalar_lea.vmem [#allocation9], %s1059
          %1061 = dma.done %s1057, 2048
        $region56: #{tpu_custom_call.1} parent=51 // pred_fallthru
          _
      $region52: #{tpu_custom_call.1} parent=5 // pred_fallthru
        _
    $region6: #{tpu_custom_call.1} parent=1 // loop_footer
      %s19 = sadd.s32 1, %s15
    $region7: #{tpu_custom_call.1} parent=1 // loop_footer_branch
      %14 = sbr.rel target = $region3
    $region8: #{tpu_custom_call.1} parent=1 // loop_exit
      _
    %1062 = vsyncpa [#allocation5], 1
    %s1063 = scalar_lea.sflag [#allocation5], 1
    %1064 = vsyncpa %s1063, 1
    %1065 = vsyncpa [#allocation8], 1
    %1066 = vsyncpa [#allocation6], 1
    %s1067 = scalar_lea.sflag [#allocation6], 1
    %1068 = vsyncpa %s1067, 1

</llo_original>
